<compile_context>
chip_gen: v5e
topology: v5e:2x2
jax: 0.10.0
libtpu: 0.0.40
codegen_flags: <defaults>
</compile_context>

<pallas_src>
import jax
import jax.numpy as jnp
from jax.experimental import pallas as pl
from jax.experimental.pallas import tpu as pltpu

IN_FEATURES = 1549
H1, H2, H3, OUT = 32, 18, 12, 1
TILE_B = 2048                      # batch rows per grid step (sweep 1024-4096 per chip)
VMEM_LIMIT_BYTES = 48 * 1024 * 1024


def _round_up(n, m):
    return ((n + m - 1) // m) * m


def _mlp_kernel(x_ref, w1_ref, b1_ref, w2_ref, b2_ref,
                w3_ref, b3_ref, w4_ref, b4_ref, o_ref):
    # Cast the f32 x tile to bf16 in-kernel (VPU pack, hidden under the x DMA).
    x = x_ref[...].astype(jnp.bfloat16)

    # fc1 + ReLU: bf16 x bf16 -> f32 accumulation on the MXU (dominant matmul).
    h = jnp.dot(x, w1_ref[...], preferred_element_type=jnp.float32)
    h = jnp.maximum(h + b1_ref[...], 0.0)
    # fc2 + ReLU (f32, negligible FLOPs)
    h = jnp.dot(h, w2_ref[...], preferred_element_type=jnp.float32)
    h = jnp.maximum(h + b2_ref[...], 0.0)
    # fc3 + ReLU
    h = jnp.dot(h, w3_ref[...], preferred_element_type=jnp.float32)
    h = jnp.maximum(h + b3_ref[...], 0.0)
    # fc4 + sigmoid
    h = jnp.dot(h, w4_ref[...], preferred_element_type=jnp.float32) + b4_ref[...]
    o_ref[...] = jax.nn.sigmoid(h).astype(o_ref.dtype)


def _choose_tile(batch, tile_b):
    """Pick a batch tile: multiple of 8 (sublane-aligned) unless the batch is
    tiny, never larger than the batch, and small enough that big batches get a
    >= 2-step grid (so v7x's two TensorCores are both used)."""
    if batch <= 8:
        return batch                         # full-extent block is always legal
    tb = min(tile_b, (batch // 8) * 8)       # multiple of 8, <= batch
    if batch >= 1024:
        tb = min(tb, _round_up(-(-batch // 2), 8))   # ensure >= 2 grid steps
    return max(tb, 8)


def mlp_forward(x, params, tile_b=TILE_B):
    """params = (w1, b1, w2, b2, w3, b3, w4, b4); weights are (in, out) f32,
    biases are (1, out) f32.  x is (batch, 1549) f32 (streamed as-is)."""
    batch = x.shape[0]
    w1, b1, w2, b2, w3, b3, w4, b4 = params
    w1 = w1.astype(jnp.bfloat16)             # one-time cast of a ~100 KiB weight

    tb = _choose_tile(batch, tile_b)
    grid = (pl.cdiv(batch, tb),)             # partial last block allowed

    flops = 2 * batch * (IN_FEATURES * H1 + H1 * H2 + H2 * H3 + H3 * OUT)
    bytes_accessed = (
        batch * IN_FEATURES * 4                                  # f32 x stream
        + int(w1.size) * 2                                        # bf16 w1 (resident)
        + sum(int(p.size) * 4 for p in (b1, w2, b2, w3, b3, w4, b4))
        + batch * OUT * 4)                                        # f32 output

    out = pl.pallas_call(
        _mlp_kernel,
        out_shape=jax.ShapeDtypeStruct((batch, OUT), jnp.float32),
        grid=grid,
        in_specs=[
            # x: streamed tile-by-tile along the batch axis (double-buffered).
            pl.BlockSpec((tb, IN_FEATURES), lambda i: (i, 0)),
            # Weights / biases: full-extent blocks, constant index_map ->
            # DMA'd once, resident in VMEM across all grid steps.
            pl.BlockSpec((IN_FEATURES, H1), lambda i: (0, 0)),
            pl.BlockSpec((1, H1), lambda i: (0, 0)),
            pl.BlockSpec((H1, H2), lambda i: (0, 0)),
            pl.BlockSpec((1, H2), lambda i: (0, 0)),
            pl.BlockSpec((H2, H3), lambda i: (0, 0)),
            pl.BlockSpec((1, H3), lambda i: (0, 0)),
            pl.BlockSpec((H3, OUT), lambda i: (0, 0)),
            pl.BlockSpec((1, OUT), lambda i: (0, 0)),
        ],
        out_specs=pl.BlockSpec((tb, OUT), lambda i: (i, 0)),
        compiler_params=pltpu.CompilerParams(
            # Independent batch tiles -> v7x shards tiles across its 2 TCs.
            dimension_semantics=("parallel",),
            vmem_limit_bytes=VMEM_LIMIT_BYTES,
        ),
        cost_estimate=pl.CostEstimate(
            flops=flops,
            transcendentals=batch * OUT,
            bytes_accessed=bytes_accessed,
        ),
    )(x, w1, b1, w2, b2, w3, b3, w4, b4)
    return out


def init_params(key):
    """Deterministic PyTorch-Linear-style init (uniform +/- 1/sqrt(fan_in))."""
    dims = [(IN_FEATURES, H1), (H1, H2), (H2, H3), (H3, OUT)]
    params = []
    for (fan_in, fan_out) in dims:
        key, kw, kb = jax.random.split(key, 3)
        bound = 1.0 / jnp.sqrt(fan_in)
        w = jax.random.uniform(kw, (fan_in, fan_out), jnp.float32, -bound, bound)
        b = jax.random.uniform(kb, (1, fan_out), jnp.float32, -bound, bound)
        params += [w, b]
    return tuple(params)


def reference_forward_matched(x, params):
    """Reference with the same bf16 x/w1 numerics as the kernel (f32 accum)."""
    w1, b1, w2, b2, w3, b3, w4, b4 = params
    xb = x.astype(jnp.bfloat16)
    w1b = w1.astype(jnp.bfloat16)
    h = jnp.maximum(jnp.dot(xb, w1b, preferred_element_type=jnp.float32) + b1, 0.0)
    h = jnp.maximum(jnp.dot(h, w2, preferred_element_type=jnp.float32) + b2, 0.0)
    h = jnp.maximum(jnp.dot(h, w3, preferred_element_type=jnp.float32) + b3, 0.0)
    return jax.nn.sigmoid(jnp.dot(h, w4, preferred_element_type=jnp.float32) + b4)


def reference_forward_f32(x, params):
    """Full-precision reference (no bf16 cast)."""
    w1, b1, w2, b2, w3, b3, w4, b4 = params
    h = jnp.maximum(x @ w1 + b1, 0.0)
    h = jnp.maximum(h @ w2 + b2, 0.0)
    h = jnp.maximum(h @ w3 + b3, 0.0)
    return jax.nn.sigmoid(h @ w4 + b4)


if __name__ == "__main__":
    key = jax.random.PRNGKey(0)
    key, kdata = jax.random.split(key)
    params = init_params(key)

    # batch=8: exact tile.  batch=13: exercises the partial (masked) last block.
    for batch in (8, 13):
        kdata, kx = jax.random.split(kdata)
        x = jax.random.normal(kx, (batch, IN_FEATURES), jnp.float32)

        out = jax.block_until_ready(mlp_forward(x, params))

        ref_matched = reference_forward_matched(x, params)
        ref_f32 = reference_forward_f32(x, params)

        assert out.shape == (batch, OUT)
        # Tight check vs. a reference using the kernel's exact bf16/f32 numerics.
        assert jnp.allclose(out, ref_matched, atol=1e-4, rtol=1e-4), \
            float(jnp.max(jnp.abs(out - ref_matched)))
        # Loose sanity check vs. the pure-f32 reference (bf16 x/w1 in fc1).
        assert jnp.allclose(out, ref_f32, atol=1e-2, rtol=1e-2), \
            float(jnp.max(jnp.abs(out - ref_f32)))

    print("KERNEL_OK")
</pallas_src>

<mosaic_0001>
module attributes {stable_mosaic.version = 11 : i64} {
  func.func @_mlp_kernel(%arg0: i32, %arg1: memref<8x1549xf32, #tpu.memory_space<vmem>>, %arg2: memref<1549x32xbf16, #tpu.memory_space<vmem>>, %arg3: memref<1x32xf32, #tpu.memory_space<vmem>>, %arg4: memref<32x18xf32, #tpu.memory_space<vmem>>, %arg5: memref<1x18xf32, #tpu.memory_space<vmem>>, %arg6: memref<18x12xf32, #tpu.memory_space<vmem>>, %arg7: memref<1x12xf32, #tpu.memory_space<vmem>>, %arg8: memref<12x1xf32, #tpu.memory_space<vmem>>, %arg9: memref<1x1xf32, #tpu.memory_space<vmem>>, %arg10: memref<8x1xf32, #tpu.memory_space<vmem>>) attributes {dimension_semantics = [#tpu.dimension_semantics<parallel>], iteration_bounds = array<i64: 1>, scalar_prefetch = 0 : i64, scratch_operands = 0 : i64, tpu.core_type = #tpu.core_type<tc>, window_params = [{transform_indices = @transform_0, window_bounds = array<i64: 8, 1549>}, {pipeline_mode = #tpu.pipeline_mode<synchronous>, transform_indices = @transform_1, window_bounds = array<i64: 1549, 32>}, {pipeline_mode = #tpu.pipeline_mode<synchronous>, transform_indices = @transform_2, window_bounds = array<i64: 1, 32>}, {pipeline_mode = #tpu.pipeline_mode<synchronous>, transform_indices = @transform_3, window_bounds = array<i64: 32, 18>}, {pipeline_mode = #tpu.pipeline_mode<synchronous>, transform_indices = @transform_4, window_bounds = array<i64: 1, 18>}, {pipeline_mode = #tpu.pipeline_mode<synchronous>, transform_indices = @transform_5, window_bounds = array<i64: 18, 12>}, {pipeline_mode = #tpu.pipeline_mode<synchronous>, transform_indices = @transform_6, window_bounds = array<i64: 1, 12>}, {pipeline_mode = #tpu.pipeline_mode<synchronous>, transform_indices = @transform_7, window_bounds = array<i64: 12, 1>}, {pipeline_mode = #tpu.pipeline_mode<synchronous>, transform_indices = @transform_8, window_bounds = array<i64: 1, 1>}, {transform_indices = @transform_9, window_bounds = array<i64: 8, 1>}]} {
    %c0 = arith.constant 0 : index
    %c0_0 = arith.constant 0 : index
    %0 = vector.load %arg1[%c0, %c0_0] : memref<8x1549xf32, #tpu.memory_space<vmem>>, vector<8x1549xf32>
    %1 = arith.truncf %0 : vector<8x1549xf32> to vector<8x1549xbf16>
    %c0_1 = arith.constant 0 : index
    %c0_2 = arith.constant 0 : index
    %2 = vector.load %arg2[%c0_1, %c0_2] : memref<1549x32xbf16, #tpu.memory_space<vmem>>, vector<1549x32xbf16>
    %cst = arith.constant dense<0.000000e+00> : vector<8x32xf32>
    %3 = tpu.matmul %1, %2, %cst {dimension_numbers = #tpu.dot_dimension_numbers<[1], [0], [0], [1], [0, 0, 1, 1], [], []>} : vector<8x1549xbf16>, vector<1549x32xbf16>, vector<8x32xf32> -> vector<8x32xf32>
    %c0_3 = arith.constant 0 : index
    %c0_4 = arith.constant 0 : index
    %4 = vector.load %arg3[%c0_3, %c0_4] : memref<1x32xf32, #tpu.memory_space<vmem>>, vector<1x32xf32>
    %5 = vector.broadcast %4 : vector<1x32xf32> to vector<8x32xf32>
    %6 = arith.addf %3, %5 : vector<8x32xf32>
    %cst_5 = arith.constant 0.000000e+00 : f32
    %7 = vector.broadcast %cst_5 : f32 to vector<8x32xf32>
    %8 = arith.maximumf %6, %7 : vector<8x32xf32>
    %c0_6 = arith.constant 0 : index
    %c0_7 = arith.constant 0 : index
    %9 = vector.load %arg4[%c0_6, %c0_7] : memref<32x18xf32, #tpu.memory_space<vmem>>, vector<32x18xf32>
    %cst_8 = arith.constant dense<0.000000e+00> : vector<8x18xf32>
    %10 = tpu.matmul %8, %9, %cst_8 {dimension_numbers = #tpu.dot_dimension_numbers<[1], [0], [0], [1], [0, 0, 1, 1], [], []>} : vector<8x32xf32>, vector<32x18xf32>, vector<8x18xf32> -> vector<8x18xf32>
    %c0_9 = arith.constant 0 : index
    %c0_10 = arith.constant 0 : index
    %11 = vector.load %arg5[%c0_9, %c0_10] : memref<1x18xf32, #tpu.memory_space<vmem>>, vector<1x18xf32>
    %12 = vector.broadcast %11 : vector<1x18xf32> to vector<8x18xf32>
    %13 = arith.addf %10, %12 : vector<8x18xf32>
    %cst_11 = arith.constant 0.000000e+00 : f32
    %14 = vector.broadcast %cst_11 : f32 to vector<8x18xf32>
    %15 = arith.maximumf %13, %14 : vector<8x18xf32>
    %c0_12 = arith.constant 0 : index
    %c0_13 = arith.constant 0 : index
    %16 = vector.load %arg6[%c0_12, %c0_13] : memref<18x12xf32, #tpu.memory_space<vmem>>, vector<18x12xf32>
    %cst_14 = arith.constant dense<0.000000e+00> : vector<8x12xf32>
    %17 = tpu.matmul %15, %16, %cst_14 {dimension_numbers = #tpu.dot_dimension_numbers<[1], [0], [0], [1], [0, 0, 1, 1], [], []>} : vector<8x18xf32>, vector<18x12xf32>, vector<8x12xf32> -> vector<8x12xf32>
    %c0_15 = arith.constant 0 : index
    %c0_16 = arith.constant 0 : index
    %18 = vector.load %arg7[%c0_15, %c0_16] : memref<1x12xf32, #tpu.memory_space<vmem>>, vector<1x12xf32>
    %19 = vector.broadcast %18 : vector<1x12xf32> to vector<8x12xf32>
    %20 = arith.addf %17, %19 : vector<8x12xf32>
    %cst_17 = arith.constant 0.000000e+00 : f32
    %21 = vector.broadcast %cst_17 : f32 to vector<8x12xf32>
    %22 = arith.maximumf %20, %21 : vector<8x12xf32>
    %c0_18 = arith.constant 0 : index
    %c0_19 = arith.constant 0 : index
    %23 = vector.load %arg8[%c0_18, %c0_19] : memref<12x1xf32, #tpu.memory_space<vmem>>, vector<12x1xf32>
    %cst_20 = arith.constant dense<0.000000e+00> : vector<8x1xf32>
    %24 = tpu.matmul %22, %23, %cst_20 {dimension_numbers = #tpu.dot_dimension_numbers<[1], [0], [0], [1], [0, 0, 1, 1], [], []>} : vector<8x12xf32>, vector<12x1xf32>, vector<8x1xf32> -> vector<8x1xf32>
    %c0_21 = arith.constant 0 : index
    %c0_22 = arith.constant 0 : index
    %25 = vector.load %arg9[%c0_21, %c0_22] : memref<1x1xf32, #tpu.memory_space<vmem>>, vector<1x1xf32>
    %26 = vector.broadcast %25 : vector<1x1xf32> to vector<8x1xf32>
    %27 = arith.addf %24, %26 : vector<8x1xf32>
    %28 = arith.negf %27 : vector<8x1xf32>
    %29 = math.exp %28 : vector<8x1xf32>
    %cst_23 = arith.constant 1.000000e+00 : f32
    %30 = vector.broadcast %cst_23 : f32 to vector<8x1xf32>
    %31 = arith.addf %30, %29 : vector<8x1xf32>
    %32 = arith.divf %30, %31 : vector<8x1xf32>
    %c0_24 = arith.constant 0 : index
    %c0_25 = arith.constant 0 : index
    %33 = vector.load %arg10[%c0_24, %c0_25] : memref<8x1xf32, #tpu.memory_space<vmem>>, vector<8x1xf32>
    tpu.vector_store %arg10[%c0_24, %c0_25], %32 {strides = array<i32>} : memref<8x1xf32, #tpu.memory_space<vmem>>, vector<8x1xf32>,
    return
  }
  func.func @transform_0(%arg0: i32) -> (i32, i32) {
    %c0_i32 = arith.constant 0 : i32
    %c0_i32_0 = arith.constant 0 : i32
    return %arg0, %c0_i32 : i32, i32
  }
  func.func @transform_1(%arg0: i32) -> (i32, i32) {
    %c0_i32 = arith.constant 0 : i32
    %c0_i32_0 = arith.constant 0 : i32
    %c0_i32_1 = arith.constant 0 : i32
    return %c0_i32, %c0_i32_0 : i32, i32
  }
  func.func @transform_2(%arg0: i32) -> (i32, i32) {
    %c0_i32 = arith.constant 0 : i32
    %c0_i32_0 = arith.constant 0 : i32
    %c0_i32_1 = arith.constant 0 : i32
    return %c0_i32, %c0_i32_0 : i32, i32
  }
  func.func @transform_3(%arg0: i32) -> (i32, i32) {
    %c0_i32 = arith.constant 0 : i32
    %c0_i32_0 = arith.constant 0 : i32
    %c0_i32_1 = arith.constant 0 : i32
    return %c0_i32, %c0_i32_0 : i32, i32
  }
  func.func @transform_4(%arg0: i32) -> (i32, i32) {
    %c0_i32 = arith.constant 0 : i32
    %c0_i32_0 = arith.constant 0 : i32
    %c0_i32_1 = arith.constant 0 : i32
    return %c0_i32, %c0_i32_0 : i32, i32
  }
  func.func @transform_5(%arg0: i32) -> (i32, i32) {
    %c0_i32 = arith.constant 0 : i32
    %c0_i32_0 = arith.constant 0 : i32
    %c0_i32_1 = arith.constant 0 : i32
    return %c0_i32, %c0_i32_0 : i32, i32
  }
  func.func @transform_6(%arg0: i32) -> (i32, i32) {
    %c0_i32 = arith.constant 0 : i32
    %c0_i32_0 = arith.constant 0 : i32
    %c0_i32_1 = arith.constant 0 : i32
    return %c0_i32, %c0_i32_0 : i32, i32
  }
  func.func @transform_7(%arg0: i32) -> (i32, i32) {
    %c0_i32 = arith.constant 0 : i32
    %c0_i32_0 = arith.constant 0 : i32
    %c0_i32_1 = arith.constant 0 : i32
    return %c0_i32, %c0_i32_0 : i32, i32
  }
  func.func @transform_8(%arg0: i32) -> (i32, i32) {
    %c0_i32 = arith.constant 0 : i32
    %c0_i32_0 = arith.constant 0 : i32
    %c0_i32_1 = arith.constant 0 : i32
    return %c0_i32, %c0_i32_0 : i32, i32
  }
  func.func @transform_9(%arg0: i32) -> (i32, i32) {
    %c0_i32 = arith.constant 0 : i32
    %c0_i32_0 = arith.constant 0 : i32
    return %arg0, %c0_i32 : i32, i32
  }
}

</mosaic_0001>

<llo_original>
// kernel: tpu_custom_call.1
$region0: #{tpu_custom_call.1}
  #allocation0 [shape = 'u32[]', space=smem, size = 0x4, offset = 0x4, fixed_abs, tag = 'smem constant byte address 0x4 - core index']
  #allocation1 [shape = 'u32[72,128]{1,0:T(1,128)}', space=vmem, size = 0x9000, scoped, tag = 'internal scratch']
  #allocation2 [shape = 'f32[1,1]{1,0:T(1,128)S(1)}', space=vmem, size = 0x200, scoped, tag = 'scoped memory for tpu_custom_call.1']
  %s0 = inlined_call_operand.vmem [shape: f32[8,1549], index: 0, kind: input, shape index: {}]
  %s1 = inlined_call_operand.vmem [shape: bf16[1549,32], index: 1, kind: input, shape index: {}]
  %s2 = inlined_call_operand.vmem [shape: f32[1,32], index: 2, kind: input, shape index: {}]
  %s3 = inlined_call_operand.vmem [shape: f32[32,18], index: 3, kind: input, shape index: {}]
  %s4 = inlined_call_operand.vmem [shape: f32[1,18], index: 4, kind: input, shape index: {}]
  %s5 = inlined_call_operand.vmem [shape: f32[18,12], index: 5, kind: input, shape index: {}]
  %s6 = inlined_call_operand.vmem [shape: f32[1,12], index: 6, kind: input, shape index: {}]
  %s7 = inlined_call_operand.vmem [shape: f32[12,1], index: 7, kind: input, shape index: {}]
  %s8 = inlined_call_operand.<no memory space> [shape: f32[1,1], index: 8, kind: input, shape index: {}]
  %s9 = inlined_call_operand.vmem [shape: f32[8,1], index: 9, kind: output, shape index: {}]
  %s10 = sld [smem:[#allocation0]]
  $region46: #{tpu_custom_call.1} parent=0
    _
  %s12 = ssub.s32 1, %s10
  %s13 = scalar_select 0, %s12, %s10
  %v14 = vstv %s8
  %15 = vst [vmem:[#allocation2] sm:$0x1] %v14
  // Predicated region
  $region2: #{tpu_custom_call.1} parent=0 // pred_check
    _
  $region3: #{tpu_custom_call.1} parent=0 // pred_check_branch
    %17 = sbr.rel (0) target = $region5
  $region4: #{tpu_custom_call.1} parent=0 // pred_region
    _
  $region5: #{tpu_custom_call.1} parent=0 // pred_fallthru
    _
  // Predicated region
  $region6: #{tpu_custom_call.1} parent=0 // pred_check
    _
  $region7: #{tpu_custom_call.1} parent=0 // pred_check_branch
    %19 = sbr.rel (0) target = $region9
  $region8: #{tpu_custom_call.1} parent=0 // pred_region
    _
  $region9: #{tpu_custom_call.1} parent=0 // pred_fallthru
    _
  // Predicated region
  $region10: #{tpu_custom_call.1} parent=0 // pred_check
    _
  $region11: #{tpu_custom_call.1} parent=0 // pred_check_branch
    %21 = sbr.rel (0) target = $region13
  $region12: #{tpu_custom_call.1} parent=0 // pred_region
    _
  $region13: #{tpu_custom_call.1} parent=0 // pred_fallthru
    _
  // Predicated region
  $region14: #{tpu_custom_call.1} parent=0 // pred_check
    _
  $region15: #{tpu_custom_call.1} parent=0 // pred_check_branch
    %23 = sbr.rel (0) target = $region17
  $region16: #{tpu_custom_call.1} parent=0 // pred_region
    _
  $region17: #{tpu_custom_call.1} parent=0 // pred_fallthru
    _
  // Predicated region
  $region18: #{tpu_custom_call.1} parent=0 // pred_check
    _
  $region19: #{tpu_custom_call.1} parent=0 // pred_check_branch
    %25 = sbr.rel (0) target = $region21
  $region20: #{tpu_custom_call.1} parent=0 // pred_region
    _
  $region21: #{tpu_custom_call.1} parent=0 // pred_fallthru
    _
  // Predicated region
  $region22: #{tpu_custom_call.1} parent=0 // pred_check
    _
  $region23: #{tpu_custom_call.1} parent=0 // pred_check_branch
    %27 = sbr.rel (0) target = $region25
  $region24: #{tpu_custom_call.1} parent=0 // pred_region
    _
  $region25: #{tpu_custom_call.1} parent=0 // pred_fallthru
    _
  // Predicated region
  $region26: #{tpu_custom_call.1} parent=0 // pred_check
    _
  $region27: #{tpu_custom_call.1} parent=0 // pred_check_branch
    %29 = sbr.rel (0) target = $region29
  $region28: #{tpu_custom_call.1} parent=0 // pred_region
    _
  $region29: #{tpu_custom_call.1} parent=0 // pred_fallthru
    _
  // Predicated region
  $region30: #{tpu_custom_call.1} parent=0 // pred_check
    _
  $region31: #{tpu_custom_call.1} parent=0 // pred_check_branch
    %31 = sbr.rel (0) target = $region33
  $region32: #{tpu_custom_call.1} parent=0 // pred_region
    _
  $region33: #{tpu_custom_call.1} parent=0 // pred_fallthru
    _
  // Predicated region
  $region34: #{tpu_custom_call.1} parent=0 // pred_check
    _
  $region35: #{tpu_custom_call.1} parent=0 // pred_check_branch
    %33 = sbr.rel (0) target = $region37
  $region36: #{tpu_custom_call.1} parent=0 // pred_region
    _
  $region37: #{tpu_custom_call.1} parent=0 // pred_fallthru
    _
  %v35 = vld [vmem:[%s0] sm:$0xff]
  %v36 = vld [vmem:[%s0 + $0x8] sm:$0xff]
  %v37 = vld [vmem:[%s0 + $0x10] sm:$0xff]
  %v38 = vld [vmem:[%s0 + $0x18] sm:$0xff]
  %v39 = vld [vmem:[%s0 + $0x20] sm:$0xff]
  %v40 = vld [vmem:[%s0 + $0x28] sm:$0xff]
  %v41 = vld [vmem:[%s0 + $0x30] sm:$0xff]
  %v42 = vld [vmem:[%s0 + $0x38] sm:$0xff]
  %v43 = vld [vmem:[%s0 + $0x40] sm:$0xff]
  %v44 = vld [vmem:[%s0 + $0x48] sm:$0xff]
  %v45 = vld [vmem:[%s0 + $0x50] sm:$0xff]
  %v46 = vld [vmem:[%s0 + $0x58] sm:$0xff]
  %v47 = vld [vmem:[%s0 + $0x60] sm:$0xff]
  %v48 = vpack.c.bf16 %v35, %v35
  %v49 = vpack.c.bf16 %v36, %v36
  %v50 = vpack.c.bf16 %v37, %v37
  %v51 = vpack.c.bf16 %v38, %v38
  %v52 = vpack.c.bf16 %v39, %v39
  %v53 = vpack.c.bf16 %v40, %v40
  %v54 = vpack.c.bf16 %v41, %v41
  %v55 = vpack.c.bf16 %v42, %v42
  %v56 = vpack.c.bf16 %v43, %v43
  %v57 = vpack.c.bf16 %v44, %v44
  %v58 = vpack.c.bf16 %v45, %v45
  %v59 = vpack.c.bf16 %v46, %v46
  %v60 = vpack.c.bf16 %v47, %v47
  %v61 = vld [vmem:[%s1] sm:$0xf]
  %v62 = vld [vmem:[%s1 + $0x4] sm:$0xf]
  %v63 = vld [vmem:[%s1 + $0x8] sm:$0xf]
  %v64 = vld [vmem:[%s1 + $0xc] sm:$0xf]
  %v65 = vld [vmem:[%s1 + $0x10] sm:$0xf]
  %v66 = vld [vmem:[%s1 + $0x14] sm:$0xf]
  %v67 = vld [vmem:[%s1 + $0x18] sm:$0xf]
  %v68 = vld [vmem:[%s1 + $0x1c] sm:$0xf]
  %v69 = vld [vmem:[%s1 + $0x20] sm:$0xf]
  %v70 = vld [vmem:[%s1 + $0x24] sm:$0xf]
  %v71 = vld [vmem:[%s1 + $0x28] sm:$0xf]
  %v72 = vld [vmem:[%s1 + $0x2c] sm:$0xf]
  %v73 = vld [vmem:[%s1 + $0x30] sm:$0xf]
  %v74 = vld [vmem:[%s1 + $0x34] sm:$0xf]
  %v75 = vld [vmem:[%s1 + $0x38] sm:$0xf]
  %v76 = vld [vmem:[%s1 + $0x3c] sm:$0xf]
  %v77 = vld [vmem:[%s1 + $0x40] sm:$0xf]
  %v78 = vld [vmem:[%s1 + $0x44] sm:$0xf]
  %v79 = vld [vmem:[%s1 + $0x48] sm:$0xf]
  %v80 = vld [vmem:[%s1 + $0x4c] sm:$0xf]
  %v81 = vld [vmem:[%s1 + $0x50] sm:$0xf]
  %v82 = vld [vmem:[%s1 + $0x54] sm:$0xf]
  %v83 = vld [vmem:[%s1 + $0x58] sm:$0xf]
  %v84 = vld [vmem:[%s1 + $0x5c] sm:$0xf]
  %v85 = vld [vmem:[%s1 + $0x60] sm:$0xf]
  %v86 = vld [vmem:[%s1 + $0x64] sm:$0xf]
  %v87 = vld [vmem:[%s1 + $0x68] sm:$0xf]
  %v88 = vld [vmem:[%s1 + $0x6c] sm:$0xf]
  %v89 = vld [vmem:[%s1 + $0x70] sm:$0xf]
  %v90 = vld [vmem:[%s1 + $0x74] sm:$0xf]
  %v91 = vld [vmem:[%s1 + $0x78] sm:$0xf]
  %v92 = vld [vmem:[%s1 + $0x7c] sm:$0xf]
  %v93 = vld [vmem:[%s1 + $0x80] sm:$0xf]
  %v94 = vld [vmem:[%s1 + $0x84] sm:$0xf]
  %v95 = vld [vmem:[%s1 + $0x88] sm:$0xf]
  %v96 = vld [vmem:[%s1 + $0x8c] sm:$0xf]
  %v97 = vld [vmem:[%s1 + $0x90] sm:$0xf]
  %v98 = vld [vmem:[%s1 + $0x94] sm:$0xf]
  %v99 = vld [vmem:[%s1 + $0x98] sm:$0xf]
  %v100 = vld [vmem:[%s1 + $0x9c] sm:$0xf]
  %v101 = vld [vmem:[%s1 + $0xa0] sm:$0xf]
  %v102 = vld [vmem:[%s1 + $0xa4] sm:$0xf]
  %v103 = vld [vmem:[%s1 + $0xa8] sm:$0xf]
  %v104 = vld [vmem:[%s1 + $0xac] sm:$0xf]
  %v105 = vld [vmem:[%s1 + $0xb0] sm:$0xf]
  %v106 = vld [vmem:[%s1 + $0xb4] sm:$0xf]
  %v107 = vld [vmem:[%s1 + $0xb8] sm:$0xf]
  %v108 = vld [vmem:[%s1 + $0xbc] sm:$0xf]
  %v109 = vld [vmem:[%s1 + $0xc0] sm:$0xf]
  %v110 = vld [vmem:[%s1 + $0xc4] sm:$0xf]
  %v111 = vld [vmem:[%s1 + $0xc8] sm:$0xf]
  %v112 = vld [vmem:[%s1 + $0xcc] sm:$0xf]
  %v113 = vld [vmem:[%s1 + $0xd0] sm:$0xf]
  %v114 = vld [vmem:[%s1 + $0xd4] sm:$0xf]
  %v115 = vld [vmem:[%s1 + $0xd8] sm:$0xf]
  %v116 = vld [vmem:[%s1 + $0xdc] sm:$0xf]
  %v117 = vld [vmem:[%s1 + $0xe0] sm:$0xf]
  %v118 = vld [vmem:[%s1 + $0xe4] sm:$0xf]
  %v119 = vld [vmem:[%s1 + $0xe8] sm:$0xf]
  %v120 = vld [vmem:[%s1 + $0xec] sm:$0xf]
  %v121 = vld [vmem:[%s1 + $0xf0] sm:$0xf]
  %v122 = vld [vmem:[%s1 + $0xf4] sm:$0xf]
  %v123 = vld [vmem:[%s1 + $0xf8] sm:$0xf]
  %v124 = vld [vmem:[%s1 + $0xfc] sm:$0xf]
  %v125 = vld [vmem:[%s1 + $0x100] sm:$0xf]
  %v126 = vld [vmem:[%s1 + $0x104] sm:$0xf]
  %v127 = vld [vmem:[%s1 + $0x108] sm:$0xf]
  %v128 = vld [vmem:[%s1 + $0x10c] sm:$0xf]
  %v129 = vld [vmem:[%s1 + $0x110] sm:$0xf]
  %v130 = vld [vmem:[%s1 + $0x114] sm:$0xf]
  %v131 = vld [vmem:[%s1 + $0x118] sm:$0xf]
  %v132 = vld [vmem:[%s1 + $0x11c] sm:$0xf]
  %v133 = vld [vmem:[%s1 + $0x120] sm:$0xf]
  %v134 = vld [vmem:[%s1 + $0x124] sm:$0xf]
  %v135 = vld [vmem:[%s1 + $0x128] sm:$0xf]
  %v136 = vld [vmem:[%s1 + $0x12c] sm:$0xf]
  %v137 = vld [vmem:[%s1 + $0x130] sm:$0xf]
  %v138 = vld [vmem:[%s1 + $0x134] sm:$0xf]
  %v139 = vld [vmem:[%s1 + $0x138] sm:$0xf]
  %v140 = vld [vmem:[%s1 + $0x13c] sm:$0xf]
  %v141 = vld [vmem:[%s1 + $0x140] sm:$0xf]
  %v142 = vld [vmem:[%s1 + $0x144] sm:$0xf]
  %v143 = vld [vmem:[%s1 + $0x148] sm:$0xf]
  %v144 = vld [vmem:[%s1 + $0x14c] sm:$0xf]
  %v145 = vld [vmem:[%s1 + $0x150] sm:$0xf]
  %v146 = vld [vmem:[%s1 + $0x154] sm:$0xf]
  %v147 = vld [vmem:[%s1 + $0x158] sm:$0xf]
  %v148 = vld [vmem:[%s1 + $0x15c] sm:$0xf]
  %v149 = vld [vmem:[%s1 + $0x160] sm:$0xf]
  %v150 = vld [vmem:[%s1 + $0x164] sm:$0xf]
  %v151 = vld [vmem:[%s1 + $0x168] sm:$0xf]
  %v152 = vld [vmem:[%s1 + $0x16c] sm:$0xf]
  %v153 = vld [vmem:[%s1 + $0x170] sm:$0xf]
  %v154 = vld [vmem:[%s1 + $0x174] sm:$0xf]
  %v155 = vld [vmem:[%s1 + $0x178] sm:$0xf]
  %v156 = vld [vmem:[%s1 + $0x17c] sm:$0xf]
  %v157 = vld [vmem:[%s1 + $0x180] sm:$0xf]
  %v158 = vld [vmem:[%s1 + $0x184] sm:$0xf]
  %v159 = vld [vmem:[%s1 + $0x188] sm:$0xf]
  %v160 = vld [vmem:[%s1 + $0x18c] sm:$0xf]
  %v161 = vld [vmem:[%s1 + $0x190] sm:$0xf]
  %v162 = vld [vmem:[%s1 + $0x194] sm:$0xf]
  %v163 = vld [vmem:[%s1 + $0x198] sm:$0xf]
  %v164 = vld [vmem:[%s1 + $0x19c] sm:$0xf]
  %v165 = vld [vmem:[%s1 + $0x1a0] sm:$0xf]
  %v166 = vld [vmem:[%s1 + $0x1a4] sm:$0xf]
  %v167 = vld [vmem:[%s1 + $0x1a8] sm:$0xf]
  %v168 = vld [vmem:[%s1 + $0x1ac] sm:$0xf]
  %v169 = vld [vmem:[%s1 + $0x1b0] sm:$0xf]
  %v170 = vld [vmem:[%s1 + $0x1b4] sm:$0xf]
  %v171 = vld [vmem:[%s1 + $0x1b8] sm:$0xf]
  %v172 = vld [vmem:[%s1 + $0x1bc] sm:$0xf]
  %v173 = vld [vmem:[%s1 + $0x1c0] sm:$0xf]
  %v174 = vld [vmem:[%s1 + $0x1c4] sm:$0xf]
  %v175 = vld [vmem:[%s1 + $0x1c8] sm:$0xf]
  %v176 = vld [vmem:[%s1 + $0x1cc] sm:$0xf]
  %v177 = vld [vmem:[%s1 + $0x1d0] sm:$0xf]
  %v178 = vld [vmem:[%s1 + $0x1d4] sm:$0xf]
  %v179 = vld [vmem:[%s1 + $0x1d8] sm:$0xf]
  %v180 = vld [vmem:[%s1 + $0x1dc] sm:$0xf]
  %v181 = vld [vmem:[%s1 + $0x1e0] sm:$0xf]
  %v182 = vld [vmem:[%s1 + $0x1e4] sm:$0xf]
  %v183 = vld [vmem:[%s1 + $0x1e8] sm:$0xf]
  %v184 = vld [vmem:[%s1 + $0x1ec] sm:$0xf]
  %v185 = vld [vmem:[%s1 + $0x1f0] sm:$0xf]
  %v186 = vld [vmem:[%s1 + $0x1f4] sm:$0xf]
  %v187 = vld [vmem:[%s1 + $0x1f8] sm:$0xf]
  %v188 = vld [vmem:[%s1 + $0x1fc] sm:$0xf]
  %v189 = vld [vmem:[%s1 + $0x200] sm:$0xf]
  %v190 = vld [vmem:[%s1 + $0x204] sm:$0xf]
  %v191 = vld [vmem:[%s1 + $0x208] sm:$0xf]
  %v192 = vld [vmem:[%s1 + $0x20c] sm:$0xf]
  %v193 = vld [vmem:[%s1 + $0x210] sm:$0xf]
  %v194 = vld [vmem:[%s1 + $0x214] sm:$0xf]
  %v195 = vld [vmem:[%s1 + $0x218] sm:$0xf]
  %v196 = vld [vmem:[%s1 + $0x21c] sm:$0xf]
  %v197 = vld [vmem:[%s1 + $0x220] sm:$0xf]
  %v198 = vld [vmem:[%s1 + $0x224] sm:$0xf]
  %v199 = vld [vmem:[%s1 + $0x228] sm:$0xf]
  %v200 = vld [vmem:[%s1 + $0x22c] sm:$0xf]
  %v201 = vld [vmem:[%s1 + $0x230] sm:$0xf]
  %v202 = vld [vmem:[%s1 + $0x234] sm:$0xf]
  %v203 = vld [vmem:[%s1 + $0x238] sm:$0xf]
  %v204 = vld [vmem:[%s1 + $0x23c] sm:$0xf]
  %v205 = vld [vmem:[%s1 + $0x240] sm:$0xf]
  %v206 = vld [vmem:[%s1 + $0x244] sm:$0xf]
  %v207 = vld [vmem:[%s1 + $0x248] sm:$0xf]
  %v208 = vld [vmem:[%s1 + $0x24c] sm:$0xf]
  %v209 = vld [vmem:[%s1 + $0x250] sm:$0xf]
  %v210 = vld [vmem:[%s1 + $0x254] sm:$0xf]
  %v211 = vld [vmem:[%s1 + $0x258] sm:$0xf]
  %v212 = vld [vmem:[%s1 + $0x25c] sm:$0xf]
  %v213 = vld [vmem:[%s1 + $0x260] sm:$0xf]
  %v214 = vld [vmem:[%s1 + $0x264] sm:$0xf]
  %v215 = vld [vmem:[%s1 + $0x268] sm:$0xf]
  %v216 = vld [vmem:[%s1 + $0x26c] sm:$0xf]
  %v217 = vld [vmem:[%s1 + $0x270] sm:$0xf]
  %v218 = vld [vmem:[%s1 + $0x274] sm:$0xf]
  %v219 = vld [vmem:[%s1 + $0x278] sm:$0xf]
  %v220 = vld [vmem:[%s1 + $0x27c] sm:$0xf]
  %v221 = vld [vmem:[%s1 + $0x280] sm:$0xf]
  %v222 = vld [vmem:[%s1 + $0x284] sm:$0xf]
  %v223 = vld [vmem:[%s1 + $0x288] sm:$0xf]
  %v224 = vld [vmem:[%s1 + $0x28c] sm:$0xf]
  %v225 = vld [vmem:[%s1 + $0x290] sm:$0xf]
  %v226 = vld [vmem:[%s1 + $0x294] sm:$0xf]
  %v227 = vld [vmem:[%s1 + $0x298] sm:$0xf]
  %v228 = vld [vmem:[%s1 + $0x29c] sm:$0xf]
  %v229 = vld [vmem:[%s1 + $0x2a0] sm:$0xf]
  %v230 = vld [vmem:[%s1 + $0x2a4] sm:$0xf]
  %v231 = vld [vmem:[%s1 + $0x2a8] sm:$0xf]
  %v232 = vld [vmem:[%s1 + $0x2ac] sm:$0xf]
  %v233 = vld [vmem:[%s1 + $0x2b0] sm:$0xf]
  %v234 = vld [vmem:[%s1 + $0x2b4] sm:$0xf]
  %v235 = vld [vmem:[%s1 + $0x2b8] sm:$0xf]
  %v236 = vld [vmem:[%s1 + $0x2bc] sm:$0xf]
  %v237 = vld [vmem:[%s1 + $0x2c0] sm:$0xf]
  %v238 = vld [vmem:[%s1 + $0x2c4] sm:$0xf]
  %v239 = vld [vmem:[%s1 + $0x2c8] sm:$0xf]
  %v240 = vld [vmem:[%s1 + $0x2cc] sm:$0xf]
  %v241 = vld [vmem:[%s1 + $0x2d0] sm:$0xf]
  %v242 = vld [vmem:[%s1 + $0x2d4] sm:$0xf]
  %v243 = vld [vmem:[%s1 + $0x2d8] sm:$0xf]
  %v244 = vld [vmem:[%s1 + $0x2dc] sm:$0xf]
  %v245 = vld [vmem:[%s1 + $0x2e0] sm:$0xf]
  %v246 = vld [vmem:[%s1 + $0x2e4] sm:$0xf]
  %v247 = vld [vmem:[%s1 + $0x2e8] sm:$0xf]
  %v248 = vld [vmem:[%s1 + $0x2ec] sm:$0xf]
  %v249 = vld [vmem:[%s1 + $0x2f0] sm:$0xf]
  %v250 = vld [vmem:[%s1 + $0x2f4] sm:$0xf]
  %v251 = vld [vmem:[%s1 + $0x2f8] sm:$0xf]
  %v252 = vld [vmem:[%s1 + $0x2fc] sm:$0xf]
  %v253 = vld [vmem:[%s1 + $0x300] sm:$0xf]
  %v254 = vld [vmem:[%s1 + $0x304] sm:$0x7]
  %v255 = vld [vmem:[%s2] sm:$0x1]
  %v257 = vperm.slane %v255, 0
  %v453 = vunpack.c.l.b16 %v61
  %v454 = vunpack.c.l.b16 %v62
  %v455 = vunpack.c.l.b16 %v63
  %v456 = vunpack.c.l.b16 %v64
  %v457 = vunpack.c.l.b16 %v65
  %v458 = vunpack.c.l.b16 %v66
  %v459 = vunpack.c.l.b16 %v67
  %v460 = vunpack.c.l.b16 %v68
  %v461 = vunpack.c.l.b16 %v69
  %v462 = vunpack.c.l.b16 %v70
  %v463 = vunpack.c.l.b16 %v71
  %v464 = vunpack.c.l.b16 %v72
  %v465 = vunpack.c.l.b16 %v73
  %v466 = vunpack.c.l.b16 %v74
  %v467 = vunpack.c.l.b16 %v75
  %v468 = vunpack.c.l.b16 %v76
  %v469 = vunpack.c.l.b16 %v77
  %v470 = vunpack.c.l.b16 %v78
  %v471 = vunpack.c.l.b16 %v79
  %v472 = vunpack.c.l.b16 %v80
  %v473 = vunpack.c.l.b16 %v81
  %v474 = vunpack.c.l.b16 %v82
  %v475 = vunpack.c.l.b16 %v83
  %v476 = vunpack.c.l.b16 %v84
  %v477 = vunpack.c.l.b16 %v85
  %v478 = vunpack.c.l.b16 %v86
  %v479 = vunpack.c.l.b16 %v87
  %v480 = vunpack.c.l.b16 %v88
  %v481 = vunpack.c.l.b16 %v89
  %v482 = vunpack.c.l.b16 %v90
  %v483 = vunpack.c.l.b16 %v91
  %v484 = vunpack.c.l.b16 %v92
  %v485 = vunpack.c.l.b16 %v93
  %v486 = vunpack.c.l.b16 %v94
  %v487 = vunpack.c.l.b16 %v95
  %v488 = vunpack.c.l.b16 %v96
  %v489 = vunpack.c.l.b16 %v97
  %v490 = vunpack.c.l.b16 %v98
  %v491 = vunpack.c.l.b16 %v99
  %v492 = vunpack.c.l.b16 %v100
  %v493 = vunpack.c.l.b16 %v101
  %v494 = vunpack.c.l.b16 %v102
  %v495 = vunpack.c.l.b16 %v103
  %v496 = vunpack.c.l.b16 %v104
  %v497 = vunpack.c.l.b16 %v105
  %v498 = vunpack.c.l.b16 %v106
  %v499 = vunpack.c.l.b16 %v107
  %v500 = vunpack.c.l.b16 %v108
  %v501 = vunpack.c.l.b16 %v109
  %v502 = vunpack.c.l.b16 %v110
  %v503 = vunpack.c.l.b16 %v111
  %v504 = vunpack.c.l.b16 %v112
  %v505 = vunpack.c.l.b16 %v113
  %v506 = vunpack.c.l.b16 %v114
  %v507 = vunpack.c.l.b16 %v115
  %v508 = vunpack.c.l.b16 %v116
  %v509 = vunpack.c.l.b16 %v117
  %v510 = vunpack.c.l.b16 %v118
  %v511 = vunpack.c.l.b16 %v119
  %v512 = vunpack.c.l.b16 %v120
  %v513 = vunpack.c.l.b16 %v121
  %v514 = vunpack.c.l.b16 %v122
  %v515 = vunpack.c.l.b16 %v123
  %v516 = vunpack.c.l.b16 %v124
  %v517 = vunpack.c.l.b16 %v125
  %v518 = vunpack.c.l.b16 %v126
  %v519 = vunpack.c.l.b16 %v127
  %v520 = vunpack.c.l.b16 %v128
  %v521 = vunpack.c.l.b16 %v129
  %v522 = vunpack.c.l.b16 %v130
  %v523 = vunpack.c.l.b16 %v131
  %v524 = vunpack.c.l.b16 %v132
  %v525 = vunpack.c.l.b16 %v133
  %v526 = vunpack.c.l.b16 %v134
  %v527 = vunpack.c.l.b16 %v135
  %v528 = vunpack.c.l.b16 %v136
  %v529 = vunpack.c.l.b16 %v137
  %v530 = vunpack.c.l.b16 %v138
  %v531 = vunpack.c.l.b16 %v139
  %v532 = vunpack.c.l.b16 %v140
  %v533 = vunpack.c.l.b16 %v141
  %v534 = vunpack.c.l.b16 %v142
  %v535 = vunpack.c.l.b16 %v143
  %v536 = vunpack.c.l.b16 %v144
  %v537 = vunpack.c.l.b16 %v145
  %v538 = vunpack.c.l.b16 %v146
  %v539 = vunpack.c.l.b16 %v147
  %v540 = vunpack.c.l.b16 %v148
  %v541 = vunpack.c.l.b16 %v149
  %v542 = vunpack.c.l.b16 %v150
  %v543 = vunpack.c.l.b16 %v151
  %v544 = vunpack.c.l.b16 %v152
  %v545 = vunpack.c.l.b16 %v153
  %v546 = vunpack.c.l.b16 %v154
  %v547 = vunpack.c.l.b16 %v155
  %v548 = vunpack.c.l.b16 %v156
  %v549 = vunpack.c.l.b16 %v157
  %v550 = vunpack.c.l.b16 %v158
  %v551 = vunpack.c.l.b16 %v159
  %v552 = vunpack.c.l.b16 %v160
  %v553 = vunpack.c.l.b16 %v161
  %v554 = vunpack.c.l.b16 %v162
  %v555 = vunpack.c.l.b16 %v163
  %v556 = vunpack.c.l.b16 %v164
  %v557 = vunpack.c.l.b16 %v165
  %v558 = vunpack.c.l.b16 %v166
  %v559 = vunpack.c.l.b16 %v167
  %v560 = vunpack.c.l.b16 %v168
  %v561 = vunpack.c.l.b16 %v169
  %v562 = vunpack.c.l.b16 %v170
  %v563 = vunpack.c.l.b16 %v171
  %v564 = vunpack.c.l.b16 %v172
  %v565 = vunpack.c.l.b16 %v173
  %v566 = vunpack.c.l.b16 %v174
  %v567 = vunpack.c.l.b16 %v175
  %v568 = vunpack.c.l.b16 %v176
  %v569 = vunpack.c.l.b16 %v177
  %v570 = vunpack.c.l.b16 %v178
  %v571 = vunpack.c.l.b16 %v179
  %v572 = vunpack.c.l.b16 %v180
  %v573 = vunpack.c.l.b16 %v181
  %v574 = vunpack.c.l.b16 %v182
  %v575 = vunpack.c.l.b16 %v183
  %v576 = vunpack.c.l.b16 %v184
  %v577 = vunpack.c.l.b16 %v185
  %v578 = vunpack.c.l.b16 %v186
  %v579 = vunpack.c.l.b16 %v187
  %v580 = vunpack.c.l.b16 %v188
  %v581 = vunpack.c.l.b16 %v189
  %v582 = vunpack.c.l.b16 %v190
  %v583 = vunpack.c.l.b16 %v191
  %v584 = vunpack.c.l.b16 %v192
  %v585 = vunpack.c.l.b16 %v193
  %v586 = vunpack.c.l.b16 %v194
  %v587 = vunpack.c.l.b16 %v195
  %v588 = vunpack.c.l.b16 %v196
  %v589 = vunpack.c.l.b16 %v197
  %v590 = vunpack.c.l.b16 %v198
  %v591 = vunpack.c.l.b16 %v199
  %v592 = vunpack.c.l.b16 %v200
  %v593 = vunpack.c.l.b16 %v201
  %v594 = vunpack.c.l.b16 %v202
  %v595 = vunpack.c.l.b16 %v203
  %v596 = vunpack.c.l.b16 %v204
  %v597 = vunpack.c.l.b16 %v205
  %v598 = vunpack.c.l.b16 %v206
  %v599 = vunpack.c.l.b16 %v207
  %v600 = vunpack.c.l.b16 %v208
  %v601 = vunpack.c.l.b16 %v209
  %v602 = vunpack.c.l.b16 %v210
  %v603 = vunpack.c.l.b16 %v211
  %v604 = vunpack.c.l.b16 %v212
  %v605 = vunpack.c.l.b16 %v213
  %v606 = vunpack.c.l.b16 %v214
  %v607 = vunpack.c.l.b16 %v215
  %v608 = vunpack.c.l.b16 %v216
  %v609 = vunpack.c.l.b16 %v217
  %v610 = vunpack.c.l.b16 %v218
  %v611 = vunpack.c.l.b16 %v219
  %v612 = vunpack.c.l.b16 %v220
  %v613 = vunpack.c.l.b16 %v221
  %v614 = vunpack.c.l.b16 %v222
  %v615 = vunpack.c.l.b16 %v223
  %v616 = vunpack.c.l.b16 %v224
  %v617 = vunpack.c.l.b16 %v225
  %v618 = vunpack.c.l.b16 %v226
  %v619 = vunpack.c.l.b16 %v227
  %v620 = vunpack.c.l.b16 %v228
  %v621 = vunpack.c.l.b16 %v229
  %v622 = vunpack.c.l.b16 %v230
  %v623 = vunpack.c.l.b16 %v231
  %v624 = vunpack.c.l.b16 %v232
  %v625 = vunpack.c.l.b16 %v233
  %v626 = vunpack.c.l.b16 %v234
  %v627 = vunpack.c.l.b16 %v235
  %v628 = vunpack.c.l.b16 %v236
  %v629 = vunpack.c.l.b16 %v237
  %v630 = vunpack.c.l.b16 %v238
  %v631 = vunpack.c.l.b16 %v239
  %v632 = vunpack.c.l.b16 %v240
  %v633 = vunpack.c.l.b16 %v241
  %v634 = vunpack.c.l.b16 %v242
  %v635 = vunpack.c.l.b16 %v243
  %v636 = vunpack.c.l.b16 %v244
  %v637 = vunpack.c.l.b16 %v245
  %v638 = vunpack.c.l.b16 %v246
  %v639 = vunpack.c.l.b16 %v247
  %v640 = vunpack.c.l.b16 %v248
  %v641 = vunpack.c.l.b16 %v249
  %v642 = vunpack.c.l.b16 %v250
  %v643 = vunpack.c.l.b16 %v251
  %v644 = vunpack.c.l.b16 %v252
  %v645 = vunpack.c.l.b16 %v253
  %v646 = vunpack.c.l.b16 %v254
  %v647 = vpack.c.b16 %v454, %v453
  %v648 = vpack.c.b16 %v456, %v455
  %v649 = vpack.c.b16 %v458, %v457
  %v650 = vpack.c.b16 %v460, %v459
  %v651 = vpack.c.b16 %v462, %v461
  %v652 = vpack.c.b16 %v464, %v463
  %v653 = vpack.c.b16 %v466, %v465
  %v654 = vpack.c.b16 %v468, %v467
  %v655 = vpack.c.b16 %v470, %v469
  %v656 = vpack.c.b16 %v472, %v471
  %v657 = vpack.c.b16 %v474, %v473
  %v658 = vpack.c.b16 %v476, %v475
  %v659 = vpack.c.b16 %v478, %v477
  %v660 = vpack.c.b16 %v480, %v479
  %v661 = vpack.c.b16 %v482, %v481
  %v662 = vpack.c.b16 %v484, %v483
  %v663 = vpack.c.b16 %v486, %v485
  %v664 = vpack.c.b16 %v488, %v487
  %v665 = vpack.c.b16 %v490, %v489
  %v666 = vpack.c.b16 %v492, %v491
  %v667 = vpack.c.b16 %v494, %v493
  %v668 = vpack.c.b16 %v496, %v495
  %v669 = vpack.c.b16 %v498, %v497
  %v670 = vpack.c.b16 %v500, %v499
  %v671 = vpack.c.b16 %v502, %v501
  %v672 = vpack.c.b16 %v504, %v503
  %v673 = vpack.c.b16 %v506, %v505
  %v674 = vpack.c.b16 %v508, %v507
  %v675 = vpack.c.b16 %v510, %v509
  %v676 = vpack.c.b16 %v512, %v511
  %v677 = vpack.c.b16 %v514, %v513
  %v678 = vpack.c.b16 %v516, %v515
  %v679 = vpack.c.b16 %v518, %v517
  %v680 = vpack.c.b16 %v520, %v519
  %v681 = vpack.c.b16 %v522, %v521
  %v682 = vpack.c.b16 %v524, %v523
  %v683 = vpack.c.b16 %v526, %v525
  %v684 = vpack.c.b16 %v528, %v527
  %v685 = vpack.c.b16 %v530, %v529
  %v686 = vpack.c.b16 %v532, %v531
  %v687 = vpack.c.b16 %v534, %v533
  %v688 = vpack.c.b16 %v536, %v535
  %v689 = vpack.c.b16 %v538, %v537
  %v690 = vpack.c.b16 %v540, %v539
  %v691 = vpack.c.b16 %v542, %v541
  %v692 = vpack.c.b16 %v544, %v543
  %v693 = vpack.c.b16 %v546, %v545
  %v694 = vpack.c.b16 %v548, %v547
  %v695 = vpack.c.b16 %v550, %v549
  %v696 = vpack.c.b16 %v552, %v551
  %v697 = vpack.c.b16 %v554, %v553
  %v698 = vpack.c.b16 %v556, %v555
  %v699 = vpack.c.b16 %v558, %v557
  %v700 = vpack.c.b16 %v560, %v559
  %v701 = vpack.c.b16 %v562, %v561
  %v702 = vpack.c.b16 %v564, %v563
  %v703 = vpack.c.b16 %v566, %v565
  %v704 = vpack.c.b16 %v568, %v567
  %v705 = vpack.c.b16 %v570, %v569
  %v706 = vpack.c.b16 %v572, %v571
  %v707 = vpack.c.b16 %v574, %v573
  %v708 = vpack.c.b16 %v576, %v575
  %v709 = vpack.c.b16 %v578, %v577
  %v710 = vpack.c.b16 %v580, %v579
  %v711 = vpack.c.b16 %v582, %v581
  %v712 = vpack.c.b16 %v584, %v583
  %v713 = vpack.c.b16 %v586, %v585
  %v714 = vpack.c.b16 %v588, %v587
  %v715 = vpack.c.b16 %v590, %v589
  %v716 = vpack.c.b16 %v592, %v591
  %v717 = vpack.c.b16 %v594, %v593
  %v718 = vpack.c.b16 %v596, %v595
  %v719 = vpack.c.b16 %v598, %v597
  %v720 = vpack.c.b16 %v600, %v599
  %v721 = vpack.c.b16 %v602, %v601
  %v722 = vpack.c.b16 %v604, %v603
  %v723 = vpack.c.b16 %v606, %v605
  %v724 = vpack.c.b16 %v608, %v607
  %v725 = vpack.c.b16 %v610, %v609
  %v726 = vpack.c.b16 %v612, %v611
  %v727 = vpack.c.b16 %v614, %v613
  %v728 = vpack.c.b16 %v616, %v615
  %v729 = vpack.c.b16 %v618, %v617
  %v730 = vpack.c.b16 %v620, %v619
  %v731 = vpack.c.b16 %v622, %v621
  %v732 = vpack.c.b16 %v624, %v623
  %v733 = vpack.c.b16 %v626, %v625
  %v734 = vpack.c.b16 %v628, %v627
  %v735 = vpack.c.b16 %v630, %v629
  %v736 = vpack.c.b16 %v632, %v631
  %v737 = vpack.c.b16 %v634, %v633
  %v738 = vpack.c.b16 %v636, %v635
  %v739 = vpack.c.b16 %v638, %v637
  %v740 = vpack.c.b16 %v640, %v639
  %v741 = vpack.c.b16 %v642, %v641
  %v742 = vpack.c.b16 %v644, %v643
  %v743 = vpack.c.b16 %v646, %v645
  %vm840 = vcmask 105472
  %v842 = vsel %vm840, %v60, 0
  %vm844 = vcmask 1045504
  %vm845 = vcmask 1046528
  %v846 = vsel %vm844, 4294967295, 65535
  %v847 = vsel %vm845, %v846, 0
  %v849 = vand.u32 %v743, %v847
  %851 = vmatpush.bf16.msra.mxu0 %v654
  %852 = vmatpush.bf16.msra.mxu0 %v653
  %853 = vmatpush.bf16.msra.mxu0 %v652
  %854 = vmatpush.bf16.msra.mxu0 %v651
  %855 = vmatpush.bf16.msra.mxu0 %v650
  %856 = vmatpush.bf16.msra.mxu0 %v649
  %857 = vmatpush.bf16.msra.mxu0 %v648
  %858 = vmatpush.bf16.msra.mxu0 %v647
  %859 = vmatmul.bf16.gmra.mxu0 %v48
  %v860 = vpop.f32.mrf.mxu0
  %v861 = vadd.f32 %v257, %v860
  %v862 = vpop.f32.mrf.mxu0
  %863 = vdwg.mxu0
  %864 = vmatpush.bf16.msra.mxu0 %v662
  %865 = vmatpush.bf16.msra.mxu0 %v661
  %866 = vmatpush.bf16.msra.mxu0 %v660
  %867 = vmatpush.bf16.msra.mxu0 %v659
  %868 = vmatpush.bf16.msra.mxu0 %v658
  %869 = vmatpush.bf16.msra.mxu0 %v657
  %870 = vmatpush.bf16.msra.mxu0 %v656
  %871 = vmatpush.bf16.msra.mxu0 %v655
  %872 = vmatmul.bf16.gmra.mxu0 %v49
  %v873 = vpop.f32.mrf.mxu0
  %v874 = vadd.f32 %v861, %v873
  %v875 = vpop.f32.mrf.mxu0
  %876 = vdwg.mxu0
  %877 = vmatpush.bf16.msra.mxu0 %v670
  %878 = vmatpush.bf16.msra.mxu0 %v669
  %879 = vmatpush.bf16.msra.mxu0 %v668
  %880 = vmatpush.bf16.msra.mxu0 %v667
  %881 = vmatpush.bf16.msra.mxu0 %v666
  %882 = vmatpush.bf16.msra.mxu0 %v665
  %883 = vmatpush.bf16.msra.mxu0 %v664
  %884 = vmatpush.bf16.msra.mxu0 %v663
  %885 = vmatmul.bf16.gmra.mxu0 %v50
  %v886 = vpop.f32.mrf.mxu0
  %v887 = vadd.f32 %v874, %v886
  %v888 = vpop.f32.mrf.mxu0
  %889 = vdwg.mxu0
  %890 = vmatpush.bf16.msra.mxu0 %v678
  %891 = vmatpush.bf16.msra.mxu0 %v677
  %892 = vmatpush.bf16.msra.mxu0 %v676
  %893 = vmatpush.bf16.msra.mxu0 %v675
  %894 = vmatpush.bf16.msra.mxu0 %v674
  %895 = vmatpush.bf16.msra.mxu0 %v673
  %896 = vmatpush.bf16.msra.mxu0 %v672
  %897 = vmatpush.bf16.msra.mxu0 %v671
  %898 = vmatmul.bf16.gmra.mxu0 %v51
  %v899 = vpop.f32.mrf.mxu0
  %v900 = vadd.f32 %v887, %v899
  %v901 = vpop.f32.mrf.mxu0
  %902 = vdwg.mxu0
  %903 = vmatpush.bf16.msra.mxu0 %v686
  %904 = vmatpush.bf16.msra.mxu0 %v685
  %905 = vmatpush.bf16.msra.mxu0 %v684
  %906 = vmatpush.bf16.msra.mxu0 %v683
  %907 = vmatpush.bf16.msra.mxu0 %v682
  %908 = vmatpush.bf16.msra.mxu0 %v681
  %909 = vmatpush.bf16.msra.mxu0 %v680
  %910 = vmatpush.bf16.msra.mxu0 %v679
  %911 = vmatmul.bf16.gmra.mxu0 %v52
  %v912 = vpop.f32.mrf.mxu0
  %v913 = vadd.f32 %v900, %v912
  %v914 = vpop.f32.mrf.mxu0
  %915 = vdwg.mxu0
  %916 = vmatpush.bf16.msra.mxu0 %v694
  %917 = vmatpush.bf16.msra.mxu0 %v693
  %918 = vmatpush.bf16.msra.mxu0 %v692
  %919 = vmatpush.bf16.msra.mxu0 %v691
  %920 = vmatpush.bf16.msra.mxu0 %v690
  %921 = vmatpush.bf16.msra.mxu0 %v689
  %922 = vmatpush.bf16.msra.mxu0 %v688
  %923 = vmatpush.bf16.msra.mxu0 %v687
  %924 = vmatmul.bf16.gmra.mxu0 %v53
  %v925 = vpop.f32.mrf.mxu0
  %v926 = vadd.f32 %v913, %v925
  %v927 = vpop.f32.mrf.mxu0
  %928 = vdwg.mxu0
  %929 = vmatpush.bf16.msra.mxu0 %v702
  %930 = vmatpush.bf16.msra.mxu0 %v701
  %931 = vmatpush.bf16.msra.mxu0 %v700
  %932 = vmatpush.bf16.msra.mxu0 %v699
  %933 = vmatpush.bf16.msra.mxu0 %v698
  %934 = vmatpush.bf16.msra.mxu0 %v697
  %935 = vmatpush.bf16.msra.mxu0 %v696
  %936 = vmatpush.bf16.msra.mxu0 %v695
  %937 = vmatmul.bf16.gmra.mxu0 %v54
  %v938 = vpop.f32.mrf.mxu0
  %v939 = vadd.f32 %v926, %v938
  %v940 = vpop.f32.mrf.mxu0
  %941 = vdwg.mxu0
  %942 = vmatpush.bf16.msra.mxu0 %v710
  %943 = vmatpush.bf16.msra.mxu0 %v709
  %944 = vmatpush.bf16.msra.mxu0 %v708
  %945 = vmatpush.bf16.msra.mxu0 %v707
  %946 = vmatpush.bf16.msra.mxu0 %v706
  %947 = vmatpush.bf16.msra.mxu0 %v705
  %948 = vmatpush.bf16.msra.mxu0 %v704
  %949 = vmatpush.bf16.msra.mxu0 %v703
  %950 = vmatmul.bf16.gmra.mxu0 %v55
  %v951 = vpop.f32.mrf.mxu0
  %v952 = vadd.f32 %v939, %v951
  %v953 = vpop.f32.mrf.mxu0
  %954 = vdwg.mxu0
  %955 = vmatpush.bf16.msra.mxu0 %v718
  %956 = vmatpush.bf16.msra.mxu0 %v717
  %957 = vmatpush.bf16.msra.mxu0 %v716
  %958 = vmatpush.bf16.msra.mxu0 %v715
  %959 = vmatpush.bf16.msra.mxu0 %v714
  %960 = vmatpush.bf16.msra.mxu0 %v713
  %961 = vmatpush.bf16.msra.mxu0 %v712
  %962 = vmatpush.bf16.msra.mxu0 %v711
  %963 = vmatmul.bf16.gmra.mxu0 %v56
  %v964 = vpop.f32.mrf.mxu0
  %v965 = vadd.f32 %v952, %v964
  %v966 = vpop.f32.mrf.mxu0
  %967 = vdwg.mxu0
  %968 = vmatpush.bf16.msra.mxu0 %v726
  %969 = vmatpush.bf16.msra.mxu0 %v725
  %970 = vmatpush.bf16.msra.mxu0 %v724
  %971 = vmatpush.bf16.msra.mxu0 %v723
  %972 = vmatpush.bf16.msra.mxu0 %v722
  %973 = vmatpush.bf16.msra.mxu0 %v721
  %974 = vmatpush.bf16.msra.mxu0 %v720
  %975 = vmatpush.bf16.msra.mxu0 %v719
  %976 = vmatmul.bf16.gmra.mxu0 %v57
  %v977 = vpop.f32.mrf.mxu0
  %v978 = vadd.f32 %v965, %v977
  %v979 = vpop.f32.mrf.mxu0
  %980 = vdwg.mxu0
  %981 = vmatpush.bf16.msra.mxu0 %v734
  %982 = vmatpush.bf16.msra.mxu0 %v733
  %983 = vmatpush.bf16.msra.mxu0 %v732
  %984 = vmatpush.bf16.msra.mxu0 %v731
  %985 = vmatpush.bf16.msra.mxu0 %v730
  %986 = vmatpush.bf16.msra.mxu0 %v729
  %987 = vmatpush.bf16.msra.mxu0 %v728
  %988 = vmatpush.bf16.msra.mxu0 %v727
  %989 = vmatmul.bf16.gmra.mxu0 %v58
  %v990 = vpop.f32.mrf.mxu0
  %v991 = vadd.f32 %v978, %v990
  %v992 = vpop.f32.mrf.mxu0
  %993 = vdwg.mxu0
  %994 = vmatpush.bf16.msra.mxu0 %v742
  %995 = vmatpush.bf16.msra.mxu0 %v741
  %996 = vmatpush.bf16.msra.mxu0 %v740
  %997 = vmatpush.bf16.msra.mxu0 %v739
  %998 = vmatpush.bf16.msra.mxu0 %v738
  %999 = vmatpush.bf16.msra.mxu0 %v737
  %1000 = vmatpush.bf16.msra.mxu0 %v736
  %1001 = vmatpush.bf16.msra.mxu0 %v735
  %1002 = vmatmul.bf16.gmra.mxu0 %v59
  %v1003 = vpop.f32.mrf.mxu0
  %v1004 = vadd.f32 %v991, %v1003
  %v1005 = vpop.f32.mrf.mxu0
  %1006 = vdwg.mxu0
  %1007 = vmatpush.bf16.msra.mxu0 0
  %1008 = vmatpush.bf16.msra.mxu0 0
  %1009 = vmatpush.bf16.msra.mxu0 0
  %1010 = vmatpush.bf16.msra.mxu0 0
  %1011 = vmatpush.bf16.msra.mxu0 0
  %1012 = vmatpush.bf16.msra.mxu0 0
  %1013 = vmatpush.bf16.msra.mxu0 0
  %1014 = vmatpush.bf16.msra.mxu0 %v849
  %1015 = vmatmul.bf16.gmra.mxu0 %v842
  %v1016 = vpop.f32.mrf.mxu0
  %v1017 = vadd.f32 %v1004, %v1016
  %v1018 = vpop.f32.mrf.mxu0
  %1019 = vdwg.mxu0
  %v1020 = vmax.f32 %v1017, 0.0
  %v1021 = vld [vmem:[%s3] sm:$0xff]
  %v1022 = vld [vmem:[%s3 + $0x8] sm:$0xff]
  %v1023 = vld [vmem:[%s3 + $0x10] sm:$0xff]
  %v1024 = vld [vmem:[%s3 + $0x18] sm:$0xff]
  %v1025 = vld [vmem:[%s4] sm:$0x1]
  %v1027 = vperm.slane %v1025, 0
  %vm1029 = vcmask 261120
  %v1031 = vsel %vm1029, %v1020, 0
  %1033 = vmatpush.msra.mxu0 0.0
  %1034 = vmatpush.msra.mxu0 0.0
  %1035 = vmatpush.msra.mxu0 0.0
  %1036 = vmatpush.msra.mxu0 0.0
  %1037 = vmatpush.msra.mxu0 0.0
  %1038 = vmatpush.msra.mxu0 0.0
  %1039 = vmatpush.msra.mxu0 0.0
  %1040 = vmatpush.msra.mxu0 0.0
  %1041 = vmatpush.msra.mxu0 0.0
  %1042 = vmatpush.msra.mxu0 0.0
  %1043 = vmatpush.msra.mxu0 0.0
  %1044 = vmatpush.msra.mxu0 0.0
  %1045 = vmatpush.msra.mxu0 %v1024
  %1046 = vmatpush.msra.mxu0 %v1023
  %1047 = vmatpush.msra.mxu0 %v1022
  %1048 = vmatpush.msra.mxu0 %v1021
  %1049 = vmatmul.f32.gmra.mxu0 %v1031
  %v1050 = vpop.f32.mrf.mxu0
  %v1051 = vadd.f32 %v1027, %v1050
  %1052 = vdwg.mxu0
  %v1053 = vmax.f32 %v1051, 0.0
  %v1054 = vld [vmem:[%s5] sm:$0xff]
  %v1055 = vld [vmem:[%s5 + $0x8] sm:$0xff]
  %v1056 = vld [vmem:[%s5 + $0x10] sm:$0x3]
  %v1057 = vld [vmem:[%s6] sm:$0x1]
  %v1059 = vperm.slane %v1057, 0
  %vm1061 = vcmask 146432
  %v1063 = vsel %vm1061, %v1053, 0
  %vm1065 = vcmask 1041408
  %v1067 = vsel %vm1065, %v1056, 0
  %1069 = vmatpush.msra.mxu0 0.0
  %1070 = vmatpush.msra.mxu0 0.0
  %1071 = vmatpush.msra.mxu0 0.0
  %1072 = vmatpush.msra.mxu0 0.0
  %1073 = vmatpush.msra.mxu0 0.0
  %1074 = vmatpush.msra.mxu0 0.0
  %1075 = vmatpush.msra.mxu0 0.0
  %1076 = vmatpush.msra.mxu0 0.0
  %1077 = vmatpush.msra.mxu0 0.0
  %1078 = vmatpush.msra.mxu0 0.0
  %1079 = vmatpush.msra.mxu0 0.0
  %1080 = vmatpush.msra.mxu0 0.0
  %1081 = vmatpush.msra.mxu0 0.0
  %1082 = vmatpush.msra.mxu0 %v1067
  %1083 = vmatpush.msra.mxu0 %v1055
  %1084 = vmatpush.msra.mxu0 %v1054
  %1085 = vmatmul.f32.gmra.mxu0 %v1063
  %v1086 = vpop.f32.mrf.mxu0
  %v1087 = vadd.f32 %v1059, %v1086
  %1088 = vdwg.mxu0
  %v1089 = vmax.f32 %v1087, 0.0
  %v1090 = vld [vmem:[%s7] sm:$0xff]
  %v1091 = vld [vmem:[%s7 + $0x8] sm:$0xf]
  %v1092 = vld [vmem:[#allocation2] sm:$0x1]
  %v1094 = vperm.slane %v1092, 0
  %vm1096 = vcmask 97280
  %v1098 = vsel %vm1096, %v1089, 0
  %vm1100 = vcmask 1043456
  %v1102 = vsel %vm1100, %v1091, 0
  %1104 = vmatpush.msra.mxu0 0.0
  %1105 = vmatpush.msra.mxu0 0.0
  %1106 = vmatpush.msra.mxu0 0.0
  %1107 = vmatpush.msra.mxu0 0.0
  %1108 = vmatpush.msra.mxu0 0.0
  %1109 = vmatpush.msra.mxu0 0.0
  %1110 = vmatpush.msra.mxu0 0.0
  %1111 = vmatpush.msra.mxu0 0.0
  %1112 = vmatpush.msra.mxu0 0.0
  %1113 = vmatpush.msra.mxu0 0.0
  %1114 = vmatpush.msra.mxu0 0.0
  %1115 = vmatpush.msra.mxu0 0.0
  %1116 = vmatpush.msra.mxu0 0.0
  %1117 = vmatpush.msra.mxu0 0.0
  %1118 = vmatpush.msra.mxu0 %v1102
  %1119 = vmatpush.msra.mxu0 %v1090
  %1120 = vmatmul.f32.gmra.mxu0 %v1098
  %v1121 = vpop.f32.mrf.mxu0
  %v1122 = vadd.f32 %v1094, %v1121
  %1123 = vdwg.mxu0
  %v1124 = vxor.u32 %v1122, 2147483648
  %v1125 = vmul.f32 %v1124, 1.442695
  %v1126 = vpow.pop %v1125
  %v1127 = vadd.f32 %v1126, 1.0
  %v1128 = vrcp.pop %v1127
  %v1129 = vmul.f32 %v1127, %v1128
  %v1130 = vsub.f32 1.0, %v1129
  %v1131 = vmul.f32 %v1128, %v1130
  %v1132 = vadd.f32 %v1128, %v1131
  %vm1133 = vweird.f32 %v1127
  %vm1134 = vweird.f32 %v1128
  %vm1135 = vmor %vm1133, %vm1134
  %v1136 = vsel %vm1135, %v1128, %v1132
  %v1137 = vand.u32 2147483647, %v1127
  %vm1138 = vcmp.eq.f32.partialorder %v1137, 8.507059e+37
  %v1139 = vand.u32 %v1127, 2147483648
  %v1140 = vor.u32 1.1754944e-38, %v1139
  %v1141 = vsel %vm1138, %v1140, %v1136
  %v1142 = vmul.f32 1.0, %v1141
  %vm1143 = vcmask 7168
  %1144 = vst.msk [vmem:[%s9] sm:$0xff] %vm1143, %v1142
  // Predicated region
  $region38: #{tpu_custom_call.1} parent=0 // pred_check
    _
  $region39: #{tpu_custom_call.1} parent=0 // pred_check_branch
    %1146 = sbr.rel (0) target = $region41
  $region40: #{tpu_custom_call.1} parent=0 // pred_region
    _
  $region41: #{tpu_custom_call.1} parent=0 // pred_fallthru
    _
  // Predicated region
  $region42: #{tpu_custom_call.1} parent=0 // pred_check
    _
  $region43: #{tpu_custom_call.1} parent=0 // pred_check_branch
    %1148 = sbr.rel (0) target = $region45
  $region44: #{tpu_custom_call.1} parent=0 // pred_region
    _
  $region45: #{tpu_custom_call.1} parent=0 // pred_fallthru
    _

</llo_original>
